<compile_context>
chip_gen: v7x
topology: tpu7x:2x2x1
jax: 0.10.0
libtpu: 0.0.40
codegen_flags: <defaults>
</compile_context>

<pallas_src>
import jax
import jax.numpy as jnp
from jax import lax
from jax.experimental import pallas as pl
from jax.experimental.pallas import tpu as pltpu

_LANE = 128
_SUB = 8
_MAX_BLOCK_BYTES = 4 * 1024 * 1024      # per input, per block (f32: 8192 rows)
_CHUNK_ROWS = 512                       # in-kernel sub-tile (multiple of 8/16/32)
_NUM_CORE_SPLITS = 2                    # v7x: 2 TensorCores; harmless on v5e/v6e
_VMEM_LIMIT_BYTES = 32 * 1024 * 1024    # lets v5e take the same blocks as v6e/v7x


def _preprocess(x):
    """((x + 1) / 2).clamp(0, 1), computed in float32 (reference / tail path)."""
    return jnp.clip((x.astype(jnp.float32) + 1.0) * 0.5, 0.0, 1.0)


def _make_mse_kernel(block_rows, chunk_rows):
    """Kernel accumulating sum((clip(g,-1,1) - clip(r,-1,1))^2) into (8,128).

    The 0.25 factor from the cancelled (x+1)/2 preprocess is applied once in
    the wrapper (_sum_sq_diff_pallas).
    """
    n_full = block_rows // chunk_rows
    rem_rows = block_rows % chunk_rows   # multiple of row alignment by construction

    def kernel(g_ref, r_ref, acc_ref):
        @pl.when(pl.program_id(1) == 0)
        def _init():
            acc_ref[...] = jnp.zeros_like(acc_ref)

        def piece(off, rows):
            g = jnp.clip(g_ref[pl.ds(off, rows), :].astype(jnp.float32), -1.0, 1.0)
            r = jnp.clip(r_ref[pl.ds(off, rows), :].astype(jnp.float32), -1.0, 1.0)
            d = g - r
            # (rows,128) -> (rows/8, 8, 128) does not cross (8,128) tiles
            # (free), and the leading-axis sum is pure cross-vreg VPU adds.
            return jnp.sum((d * d).reshape(-1, _SUB, _LANE), axis=0)

        acc = jnp.zeros((_SUB, _LANE), jnp.float32)
        if n_full > 0:
            def body(c, a):
                off = pl.multiple_of(c * chunk_rows, chunk_rows)
                return a + piece(off, chunk_rows)
            acc = lax.fori_loop(0, n_full, body, acc, unroll=True)
        if rem_rows:
            acc = acc + piece(n_full * chunk_rows, rem_rows)
        acc_ref[...] += acc

    return kernel


def _sum_sq_diff_pallas(g2d, r2d, block_rows, chunk_rows, nsplit, blocks_per_split):
    """sum((pre(g)-pre(r))^2) over a (rows, 128) slab, via 0.25*sum((clip-clip)^2)."""
    kernel = _make_mse_kernel(block_rows, chunk_rows)
    acc = pl.pallas_call(
        kernel,
        out_shape=jax.ShapeDtypeStruct((nsplit * _SUB, _LANE), jnp.float32),
        grid_spec=pltpu.PrefetchScalarGridSpec(
            num_scalar_prefetch=0,
            grid=(nsplit, blocks_per_split),
            in_specs=[
                pl.BlockSpec((block_rows, _LANE),
                             lambda c, i: (c * blocks_per_split + i, 0)),
                pl.BlockSpec((block_rows, _LANE),
                             lambda c, i: (c * blocks_per_split + i, 0)),
            ],
            # one persistent (8,128) accumulator block per core-split
            out_specs=pl.BlockSpec((_SUB, _LANE), lambda c, i: (c, 0)),
        ),
        compiler_params=pltpu.CompilerParams(
            dimension_semantics=("parallel", "arbitrary"),
            vmem_limit_bytes=_VMEM_LIMIT_BYTES),
    )(g2d, r2d)
    # preprocess cancellation: (pre(g)-pre(r))^2 == 0.25 * (clip(g)-clip(r))^2
    return 0.25 * jnp.sum(acc)


def _mse_loss(x_gen, x_ref, *, max_block_bytes=_MAX_BLOCK_BYTES, chunk_rows=_CHUNK_ROWS):
    assert x_gen.shape == x_ref.shape, "shapes must match"
    n = x_gen.size
    flat_g = x_gen.reshape(-1)
    flat_r = x_ref.reshape(-1)

    # Sublane packing: f32 -> 8 rows/vreg, bf16 -> 16, 8-bit -> 32.  Alignment
    # must satisfy BOTH operands (mixed-dtype safe).
    item_g = max(int(x_gen.dtype.itemsize), 1)
    item_r = max(int(x_ref.dtype.itemsize), 1)
    row_align = max(_SUB, 32 // min(item_g, item_r))

    # Dtype-scaled block-row budget: ~max_block_bytes per input per block.
    max_rows = (max_block_bytes // (_LANE * max(item_g, item_r))) // row_align * row_align
    max_rows = max(max_rows, row_align)

    total_rows = n // _LANE
    aligned_rows = (total_rows // row_align) * row_align

    ssq = jnp.float32(0.0)
    n_main = 0
    if aligned_rows >= row_align:
        # Near-even partition into blocks of <= max_rows so the unfused tail is
        # bounded by ~n_blocks*row_align rows instead of up to a full block.
        n_blocks = -(-aligned_rows // max_rows)                          # cdiv
        block_rows = (-(-aligned_rows // n_blocks)) // row_align * row_align
        block_rows = max(min(block_rows, aligned_rows), row_align)
        n_blocks = aligned_rows // block_rows

        # 2-way TensorCore split only when it divides evenly (no dropped blocks).
        nsplit = _NUM_CORE_SPLITS if (n_blocks % _NUM_CORE_SPLITS == 0) else 1
        blocks_per_split = n_blocks // nsplit

        blk_chunk = min(chunk_rows, block_rows)
        blk_chunk = max((blk_chunk // row_align) * row_align, row_align)

        n_main = nsplit * blocks_per_split * block_rows * _LANE
        g2d = flat_g[:n_main].reshape(-1, _LANE)
        r2d = flat_r[:n_main].reshape(-1, _LANE)
        ssq = _sum_sq_diff_pallas(g2d, r2d, block_rows, blk_chunk,
                                  nsplit, blocks_per_split)

    if n_main < n:
        # Small ragged remainder: plain jnp, no padded copy of the full inputs.
        dt = _preprocess(flat_g[n_main:]) - _preprocess(flat_r[n_main:])
        ssq = ssq + jnp.sum(dt * dt)

    return ssq / jnp.float32(n)


class LossFactory:
    """JAX/Pallas port of the PyTorch LossFactory (strategy='mse' only)."""

    def __init__(self, strategy, model=None):
        self.strategy = strategy
        self.model = model
        if strategy not in ("mse",):
            # TODO(synk): 'lpips-vgg' / 'clip' need pretrained weights; not ported.
            raise NotImplementedError(f"strategy {strategy!r} not supported in this port")

    def __call__(self, x_gen, x_ref):
        if self.strategy == "mse":
            return _mse_loss(x_gen, x_ref)
        raise NotImplementedError(self.strategy)


if __name__ == "__main__":
    key = jax.random.PRNGKey(0)
    loss_fn = LossFactory("mse")

    def ref_loss(a, b):
        d = _preprocess(a) - _preprocess(b)
        return jnp.mean(d * d)

    # Case 1: small NCHW batch, default (production) tiling, no tail.
    k1, k2, key = jax.random.split(key, 3)
    xg1 = 1.2 * jax.random.normal(k1, (2, 4, 16, 16), dtype=jnp.float32)
    xr1 = 1.2 * jax.random.normal(k2, (2, 4, 16, 16), dtype=jnp.float32)
    out1 = jax.block_until_ready(loss_fn(xg1, xr1))
    ref1 = ref_loss(xg1, xr1)
    assert jnp.allclose(out1, ref1, rtol=1e-5, atol=1e-6), (out1, ref1)

    # Case 2: multi-block grid + 2-way core split + in-kernel chunk loop (with
    # a remainder piece) + jnp tail (small overrides exercise those paths).
    k3, k4, key = jax.random.split(key, 3)
    xg2 = 1.2 * jax.random.normal(k3, (2, 3, 40, 40), dtype=jnp.float32)
    xr2 = 1.2 * jax.random.normal(k4, (2, 3, 40, 40), dtype=jnp.float32)
    out2 = jax.block_until_ready(
        _mse_loss(xg2, xr2, max_block_bytes=40 * _LANE * 4, chunk_rows=24))
    ref2 = ref_loss(xg2, xr2)
    assert jnp.allclose(out2, ref2, rtol=1e-5, atol=1e-6), (out2, ref2)

    # Case 3: bfloat16 inputs (half the HBM bytes) with a ragged total size.
    k5, k6, key = jax.random.split(key, 3)
    xg3 = (1.2 * jax.random.normal(k5, (2, 3, 33, 33), dtype=jnp.float32)).astype(jnp.bfloat16)
    xr3 = (1.2 * jax.random.normal(k6, (2, 3, 33, 33), dtype=jnp.float32)).astype(jnp.bfloat16)
    out3 = jax.block_until_ready(loss_fn(xg3, xr3))
    ref3 = ref_loss(xg3, xr3)
    assert jnp.allclose(out3, ref3, rtol=1e-4, atol=1e-6), (out3, ref3)

    # Case 4: mixed dtypes (f32 vs bf16) — row alignment keyed to both operands.
    k7, k8, key = jax.random.split(key, 3)
    xg4 = 1.2 * jax.random.normal(k7, (1, 3, 40, 40), dtype=jnp.float32)
    xr4 = (1.2 * jax.random.normal(k8, (1, 3, 40, 40), dtype=jnp.float32)).astype(jnp.bfloat16)
    out4 = jax.block_until_ready(loss_fn(xg4, xr4))
    ref4 = ref_loss(xg4, xr4)
    assert jnp.allclose(out4, ref4, rtol=1e-4, atol=1e-6), (out4, ref4)

    print("KERNEL_OK")
</pallas_src>

<mosaic_0001>
module attributes {stable_mosaic.version = 11 : i64} {
  func.func @kernel(%arg0: i32, %arg1: i32, %arg2: memref<16x128xf32, #tpu.memory_space<vmem>>, %arg3: memref<16x128xf32, #tpu.memory_space<vmem>>, %arg4: memref<8x128xf32, #tpu.memory_space<vmem>>) attributes {dimension_semantics = [#tpu.dimension_semantics<parallel>, #tpu.dimension_semantics<arbitrary>], iteration_bounds = array<i64: 1, 1>, scalar_prefetch = 0 : i64, scratch_operands = 0 : i64, tpu.core_type = #tpu.core_type<tc>, window_params = [{transform_indices = @transform_0, window_bounds = array<i64: 16, 128>}, {transform_indices = @transform_1, window_bounds = array<i64: 16, 128>}, {transform_indices = @transform_2, window_bounds = array<i64: 8, 128>}]} {
    %c0_i32 = arith.constant 0 : i32
    %0 = arith.cmpi eq, %arg1, %c0_i32 : i32
    %1 = arith.extui %0 : i1 to i32
    %c0_i32_0 = arith.constant 0 : i32
    %2 = arith.cmpi ne, %1, %c0_i32_0 : i32
    scf.if %2 {
      %cst_12 = arith.constant 0.000000e+00 : f32
      %26 = vector.broadcast %cst_12 : f32 to vector<8x128xf32>
      %c0_13 = arith.constant 0 : index
      %c0_14 = arith.constant 0 : index
      %27 = vector.load %arg4[%c0_13, %c0_14] : memref<8x128xf32, #tpu.memory_space<vmem>>, vector<8x128xf32>
      tpu.vector_store %arg4[%c0_13, %c0_14], %26 {strides = array<i32>} : memref<8x128xf32, #tpu.memory_space<vmem>>, vector<8x128xf32>,
    } else {
    }
    %cst = arith.constant 0.000000e+00 : f32
    %3 = vector.broadcast %cst : f32 to vector<8x128xf32>
    %c0_i32_1 = arith.constant 0 : i32
    %c16_i32 = arith.constant 16 : i32
    %4 = arith.muli %c0_i32_1, %c16_i32 : i32
    %5 = tpu.assume_multiple %4, 16 : i32
    %6 = arith.index_cast %5 : i32 to index
    %c0 = arith.constant 0 : index
    %7 = vector.load %arg2[%6, %c0] : memref<16x128xf32, #tpu.memory_space<vmem>>, vector<16x128xf32>
    %cst_2 = arith.constant -1.000000e+00 : f32
    %cst_3 = arith.constant 1.000000e+00 : f32
    %8 = vector.broadcast %cst_2 : f32 to vector<16x128xf32>
    %9 = arith.maximumf %8, %7 : vector<16x128xf32>
    %10 = vector.broadcast %cst_3 : f32 to vector<16x128xf32>
    %11 = arith.minimumf %10, %9 : vector<16x128xf32>
    %12 = arith.index_cast %5 : i32 to index
    %c0_4 = arith.constant 0 : index
    %13 = vector.load %arg3[%12, %c0_4] : memref<16x128xf32, #tpu.memory_space<vmem>>, vector<16x128xf32>
    %cst_5 = arith.constant -1.000000e+00 : f32
    %cst_6 = arith.constant 1.000000e+00 : f32
    %14 = vector.broadcast %cst_5 : f32 to vector<16x128xf32>
    %15 = arith.maximumf %14, %13 : vector<16x128xf32>
    %16 = vector.broadcast %cst_6 : f32 to vector<16x128xf32>
    %17 = arith.minimumf %16, %15 : vector<16x128xf32>
    %18 = arith.subf %11, %17 : vector<16x128xf32>
    %19 = arith.mulf %18, %18 : vector<16x128xf32>
    %20 = vector.shape_cast %19 : vector<16x128xf32> to vector<2x8x128xf32>
    %cst_7 = arith.constant dense<0.000000e+00> : vector<8x128xf32>
    %21 = vector.multi_reduction <add>, %20, %cst_7 [0] : vector<2x8x128xf32> to vector<8x128xf32>
    %22 = arith.addf %3, %21 : vector<8x128xf32>
    %c1_i32 = arith.constant 1 : i32
    %c0_8 = arith.constant 0 : index
    %c0_9 = arith.constant 0 : index
    %23 = vector.load %arg4[%c0_8, %c0_9] : memref<8x128xf32, #tpu.memory_space<vmem>>, vector<8x128xf32>
    %24 = arith.addf %23, %22 : vector<8x128xf32>
    %c0_10 = arith.constant 0 : index
    %c0_11 = arith.constant 0 : index
    %25 = vector.load %arg4[%c0_10, %c0_11] : memref<8x128xf32, #tpu.memory_space<vmem>>, vector<8x128xf32>
    tpu.vector_store %arg4[%c0_10, %c0_11], %24 {strides = array<i32>} : memref<8x128xf32, #tpu.memory_space<vmem>>, vector<8x128xf32>,
    return
  }
  func.func @transform_0(%arg0: i32, %arg1: i32) -> (i32, i32) {
    %c1_i32 = arith.constant 1 : i32
    %0 = arith.muli %arg0, %c1_i32 : i32
    %1 = arith.addi %0, %arg1 : i32
    %c0_i32 = arith.constant 0 : i32
    %c0_i32_0 = arith.constant 0 : i32
    return %1, %c0_i32 : i32, i32
  }
  func.func @transform_1(%arg0: i32, %arg1: i32) -> (i32, i32) {
    %c1_i32 = arith.constant 1 : i32
    %0 = arith.muli %arg0, %c1_i32 : i32
    %1 = arith.addi %0, %arg1 : i32
    %c0_i32 = arith.constant 0 : i32
    %c0_i32_0 = arith.constant 0 : i32
    return %1, %c0_i32 : i32, i32
  }
  func.func @transform_2(%arg0: i32, %arg1: i32) -> (i32, i32) {
    %c0_i32 = arith.constant 0 : i32
    %c0_i32_0 = arith.constant 0 : i32
    return %arg0, %c0_i32 : i32, i32
  }
}

</mosaic_0001>

<llo_original>
// kernel: tpu_custom_call.1
$region0: #{tpu_custom_call.1}
  #allocation0 [shape = 'u32[]', space=smem, size = 0x4, offset = 0x4, fixed_abs, tag = 'smem constant byte address 0x4 - core index']
  #allocation1 [shape = 'u32[144,128]{1,0:T(1,128)}', space=vmem, size = 0x12000, scoped, tag = 'internal scratch']
  %s0 = inlined_call_operand.hbm [shape: f32[16,128], index: 0, kind: input, shape index: {}]
  %s1 = inlined_call_operand.hbm [shape: f32[16,128], index: 1, kind: input, shape index: {}]
  %s2 = inlined_call_operand.hbm [shape: f32[8,128], index: 2, kind: output, shape index: {}]
  %s3 = sld [smem:[#allocation0]]
  $region30: #{tpu_custom_call.1} parent=0
    _
  %s5 = ssub.s32 1, %s3
  %s6 = scalar_select 0, %s5, %s3
  $region1: #{tpu_custom_call.1} parent=0
    #allocation2 [shape = 'u8[8192]{0}', space=vmem, size = 0x2000, scoped, tag = 'input window, operand 0, single buffered']
    #allocation3 [shape = 's32[1]{0}', space=sflag, size = 0x4, scoped, tag = 'scoped memory for tpu_custom_call.1']
    #allocation4 [shape = 's32[1]{0}', space=sflag, size = 0x4, scoped, tag = 'scoped memory for tpu_custom_call.1']
    #allocation5 [shape = 'u8[8192]{0}', space=vmem, size = 0x2000, scoped, tag = 'input window, operand 1, single buffered']
    #allocation6 [shape = 's32[1]{0}', space=sflag, size = 0x4, scoped, tag = 'scoped memory for tpu_custom_call.1']
    #allocation7 [shape = 'u8[4096]{0}', space=vmem, size = 0x1000, scoped, tag = 'output window, operand 0, single buffered']
    %7 = vsyncpa [#allocation3], 0
    %8 = vsyncpa [#allocation6], 0
    %9 = vsyncpa [#allocation4], 0
    // Predicated region
    $region2: #{tpu_custom_call.1} parent=1 // pred_check
      _
    $region3: #{tpu_custom_call.1} parent=1 // pred_check_branch
      %11 = sbr.rel (0) target = $region5
    $region4: #{tpu_custom_call.1} parent=1 // pred_region
      %s12 = sadd.s32 0, 0
      %s13 = smul.u32 2, %s12
      %s15 = ssub.s32 256, 256
      %16 = vsyncadd [#allocation3], %s15
      %s17 = smul.addr %s13, 128
      %s18 = scalar_lea.hbm %s0, %s17
      %s19 = sshll.u32 [#allocation2], 4
      %s20 = int_to_ptr.vmem [resolvable:$true] %s19
      %25 = dma.hbm_to_vmem [thread:$0]  %s18, 256, %s20, [#allocation3], 128, 128, 8
    $region5: #{tpu_custom_call.1} parent=1 // pred_fallthru
      _
    // Predicated region
    $region6: #{tpu_custom_call.1} parent=1 // pred_check
      _
    $region7: #{tpu_custom_call.1} parent=1 // pred_check_branch
      %27 = sbr.rel (0) target = $region9
    $region8: #{tpu_custom_call.1} parent=1 // pred_region
      %s28 = sadd.s32 0, 0
      %s29 = smul.u32 2, %s28
      %s31 = ssub.s32 256, 256
      %32 = vsyncadd [#allocation6], %s31
      %s33 = smul.addr %s29, 128
      %s34 = scalar_lea.hbm %s1, %s33
      %s35 = sshll.u32 [#allocation5], 4
      %s36 = int_to_ptr.vmem [resolvable:$true] %s35
      %41 = dma.hbm_to_vmem [thread:$0]  %s34, 256, %s36, [#allocation6], 128, 128, 8
    $region9: #{tpu_custom_call.1} parent=1 // pred_fallthru
      _
    // Predicated region
    $region10: #{tpu_custom_call.1} parent=1 // pred_check
      _
    $region11: #{tpu_custom_call.1} parent=1 // pred_check_branch
      %43 = sbr.rel (0) target = $region13
    $region12: #{tpu_custom_call.1} parent=1 // pred_region
      %44 = dma.done [#allocation3], 256
    $region13: #{tpu_custom_call.1} parent=1 // pred_fallthru
      _
    // Predicated region
    $region14: #{tpu_custom_call.1} parent=1 // pred_check
      _
    $region15: #{tpu_custom_call.1} parent=1 // pred_check_branch
      %46 = sbr.rel (0) target = $region17
    $region16: #{tpu_custom_call.1} parent=1 // pred_region
      %47 = dma.done [#allocation6], 256
    $region17: #{tpu_custom_call.1} parent=1 // pred_fallthru
      _
    %s48 = sadd.s32 0, 0
    %s49 = smul.u32 2, %s48
    %s50 = sadd.s32 0, 0
    %s51 = smul.u32 2, %s50
    %p52 = scmp.eq.s32.totalorder 0, 0
    // Predicated region
    $region18: #{tpu_custom_call.1} parent=1 // pred_check
      %p53 = pneg %p52
    $region19: #{tpu_custom_call.1} parent=1 // pred_check_branch
      %55 = sbr.rel (%p53) target = $region21
    $region20: #{tpu_custom_call.1} parent=1 // pred_region
      %56 = vst [vmem:[#allocation7] sm:$0xff] 0.0
    $region21: #{tpu_custom_call.1} parent=1 // pred_fallthru
      _
    %v57 = vld [vmem:[#allocation2] sm:$0xff]
    %v58 = vld [vmem:[#allocation2 + $0x8] sm:$0xff]
    %v59 = vmax.f32 %v57, -1.0
    %v60 = vmax.f32 %v58, -1.0
    %v61 = vmin.f32 %v59, 1.0
    %v62 = vmin.f32 %v60, 1.0
    %v63 = vld [vmem:[#allocation5] sm:$0xff]
    %v64 = vld [vmem:[#allocation5 + $0x8] sm:$0xff]
    %v65 = vmax.f32 %v63, -1.0
    %v66 = vmax.f32 %v64, -1.0
    %v67 = vmin.f32 %v65, 1.0
    %v68 = vmin.f32 %v66, 1.0
    %v69 = vsub.f32 %v61, %v67
    %v70 = vsub.f32 %v62, %v68
    %v71 = vmul.f32 %v69, %v69
    %v72 = vmul.f32 %v70, %v70
    %v73 = vadd.f32 %v71, %v72
    %v74 = vadd.f32 %v73, 0.0
    %v75 = vld [vmem:[#allocation7] sm:$0xff]
    %v76 = vadd.f32 %v75, %v74
    %77 = vst [vmem:[#allocation7] sm:$0xff] %v76
    // Predicated region
    $region22: #{tpu_custom_call.1} parent=1 // pred_check
      _
    $region23: #{tpu_custom_call.1} parent=1 // pred_check_branch
      %79 = sbr.rel (0) target = $region25
    $region24: #{tpu_custom_call.1} parent=1 // pred_region
      %s81 = ssub.s32 128, 128
      %82 = vsyncadd [#allocation4], %s81
      %s84 = sshll.u32 [#allocation7], 4
      %s85 = int_to_ptr.vmem [resolvable:$true] %s84
      %87 = dma.vmem_to_hbm [thread:$0]  %s85, 128, %s2, [#allocation4]
    $region25: #{tpu_custom_call.1} parent=1 // pred_fallthru
      _
    // Predicated region
    $region26: #{tpu_custom_call.1} parent=1 // pred_check
      _
    $region27: #{tpu_custom_call.1} parent=1 // pred_check_branch
      %89 = sbr.rel (0) target = $region29
    $region28: #{tpu_custom_call.1} parent=1 // pred_region
      %90 = dma.done [#allocation4], 128
    $region29: #{tpu_custom_call.1} parent=1 // pred_fallthru
      _
    %91 = vsyncpa [#allocation3], 1
    %92 = vsyncpa [#allocation6], 1
    %93 = vsyncpa [#allocation4], 1

</llo_original>
